<compile_context>
chip_gen: v5e
topology: v5e:2x2
jax: 0.10.0
libtpu: 0.0.40
codegen_flags: <defaults>
</compile_context>

<pallas_src>
import math
from functools import partial

import jax
import jax.numpy as jnp
from jax.experimental import pallas as pl
from jax.experimental.pallas import tpu as pltpu


# --------------------------------------------------------------------------
# Pallas kernel
# --------------------------------------------------------------------------

def _learnable_sigmoid_kernel(x_ref, slope_ref, o_ref, *, beta):
    # x:     [tm, F]   (one row-tile)
    # slope: [1,  F]   (resident, broadcast over sublanes)
    # o:     [tm, F]
    x = x_ref[...].astype(jnp.float32)
    s = slope_ref[...].astype(jnp.float32)
    y = jax.nn.sigmoid(s * x)            # overflow-safe, EUP transcendental path
    if beta != 1.0:
        y = beta * y
    o_ref[...] = y.astype(o_ref.dtype)


# --------------------------------------------------------------------------
# Wrapper
# --------------------------------------------------------------------------

def _round_up(a, b):
    return ((a + b - 1) // b) * b


def learnable_sigmoid_1d(x, slope, *, beta=1.0,
                         target_block_bytes=4 * 1024 * 1024,
                         vmem_limit_bytes=32 * 1024 * 1024):
    """beta * sigmoid(slope * x), slope broadcast along the last dim of x."""
    in_features = x.shape[-1]
    assert slope.shape == (in_features,), (slope.shape, in_features)

    orig_shape = x.shape
    M = int(math.prod(orig_shape[:-1])) if len(orig_shape) > 1 else 1
    x2 = x.reshape(M, in_features)
    slope2 = slope.reshape(1, in_features).astype(x.dtype)

    # ---- lane-dense feature axis: pad F up to a multiple of 128 --------------
    F_pad = max(128, _round_up(in_features, 128))
    if F_pad != in_features:
        x2 = jnp.pad(x2, ((0, 0), (0, F_pad - in_features)))
        slope2 = jnp.pad(slope2, ((0, 0), (0, F_pad - in_features)))

    itemsize = jnp.dtype(x.dtype).itemsize
    sub = 16 if itemsize <= 2 else 8          # sublane multiple (bf16 vs f32)
    row_bytes = F_pad * itemsize

    # ---- byte-budgeted row tile ----------------------------------------------
    # Target ~4 MiB blocks (85-94% of HBM roofline on all generations).
    tm = max(sub, (target_block_bytes // row_bytes) // sub * sub)
    # Keep (2 in + 2 out) double-buffers + slope + headroom under the VMEM budget.
    max_block_bytes = max(row_bytes * sub,
                          (vmem_limit_bytes - 2 * row_bytes) // 5)
    tm = min(tm, max(sub, (max_block_bytes // row_bytes) // sub * sub))
    # Ensure >=4 grid steps when M allows (v7x: 2 TCs + pipeline overlap).
    if M > 4 * sub:
        tm = min(tm, _round_up(pl.cdiv(M, 4), sub))
    # Never larger than the (sublane-rounded) row count.
    tm = min(tm, _round_up(M, sub))

    grid = (pl.cdiv(M, tm),)                  # ragged last block is fine (elementwise)

    cost = pl.CostEstimate(
        flops=3 * M * F_pad,
        transcendentals=M * F_pad,
        bytes_accessed=2 * M * F_pad * itemsize + F_pad * itemsize,
    )

    out = pl.pallas_call(
        partial(_learnable_sigmoid_kernel, beta=float(beta)),
        out_shape=jax.ShapeDtypeStruct((M, F_pad), x.dtype),
        grid_spec=pltpu.PrefetchScalarGridSpec(
            num_scalar_prefetch=0,
            grid=grid,
            in_specs=[
                pl.BlockSpec((tm, F_pad), lambda i: (i, 0)),   # x tile
                pl.BlockSpec((1, F_pad), lambda i: (0, 0)),    # slope (resident)
            ],
            out_specs=pl.BlockSpec((tm, F_pad), lambda i: (i, 0)),
        ),
        compiler_params=pltpu.CompilerParams(
            dimension_semantics=("parallel",),     # shard rows across TCs (v7x)
            vmem_limit_bytes=vmem_limit_bytes,     # safe on v7x's 64 MiB VMEM
        ),
        cost_estimate=cost,
    )(x2, slope2)

    if F_pad != in_features:
        out = out[:, :in_features]
    return out.reshape(orig_shape)


# --------------------------------------------------------------------------
# Demo / self-check
# --------------------------------------------------------------------------

if __name__ == "__main__":
    key = jax.random.PRNGKey(0)
    kx, ks = jax.random.split(key)

    B, T, F = 2, 8, 32            # x: [batch, seq, in_features]; F%128 != 0 exercises padding
    beta = 1.0                    # module default

    x = jax.random.normal(kx, (B, T, F), jnp.float32)
    # nn.Parameter(torch.ones(in_features)) init, perturbed so broadcasting is exercised.
    slope = jnp.ones((F,), jnp.float32) + 0.1 * jax.random.normal(ks, (F,), jnp.float32)

    fwd = jax.jit(partial(learnable_sigmoid_1d, beta=beta))
    out = fwd(x, slope)
    jax.block_until_ready(out)

    # Pure-JAX reference of the PyTorch forward.
    ref = beta * jax.nn.sigmoid(slope * x)
    assert out.shape == x.shape
    assert bool(jnp.allclose(out, ref, atol=1e-6, rtol=1e-6)), "mismatch vs reference"

    print("KERNEL_OK")
</pallas_src>

<mosaic_0001>
module attributes {stable_mosaic.version = 11 : i64} {
  func.func @_learnable_sigmoid_kernel(%arg0: i32, %arg1: memref<16x128xf32, #tpu.memory_space<vmem>>, %arg2: memref<1x128xf32, #tpu.memory_space<vmem>>, %arg3: memref<16x128xf32, #tpu.memory_space<vmem>>) attributes {dimension_semantics = [#tpu.dimension_semantics<parallel>], iteration_bounds = array<i64: 1>, scalar_prefetch = 0 : i64, scratch_operands = 0 : i64, tpu.core_type = #tpu.core_type<tc>, window_params = [{transform_indices = @transform_0, window_bounds = array<i64: 16, 128>}, {pipeline_mode = #tpu.pipeline_mode<synchronous>, transform_indices = @transform_1, window_bounds = array<i64: 1, 128>}, {transform_indices = @transform_2, window_bounds = array<i64: 16, 128>}]} {
    %c0 = arith.constant 0 : index
    %c0_0 = arith.constant 0 : index
    %0 = vector.load %arg1[%c0, %c0_0] : memref<16x128xf32, #tpu.memory_space<vmem>>, vector<16x128xf32>
    %c0_1 = arith.constant 0 : index
    %c0_2 = arith.constant 0 : index
    %1 = vector.load %arg2[%c0_1, %c0_2] : memref<1x128xf32, #tpu.memory_space<vmem>>, vector<1x128xf32>
    %2 = vector.broadcast %1 : vector<1x128xf32> to vector<16x128xf32>
    %3 = arith.mulf %2, %0 : vector<16x128xf32>
    %4 = arith.negf %3 : vector<16x128xf32>
    %5 = math.exp %4 : vector<16x128xf32>
    %cst = arith.constant 1.000000e+00 : f32
    %6 = vector.broadcast %cst : f32 to vector<16x128xf32>
    %7 = arith.addf %6, %5 : vector<16x128xf32>
    %8 = arith.divf %6, %7 : vector<16x128xf32>
    %c0_3 = arith.constant 0 : index
    %c0_4 = arith.constant 0 : index
    %9 = vector.load %arg3[%c0_3, %c0_4] : memref<16x128xf32, #tpu.memory_space<vmem>>, vector<16x128xf32>
    tpu.vector_store %arg3[%c0_3, %c0_4], %8 {strides = array<i32>} : memref<16x128xf32, #tpu.memory_space<vmem>>, vector<16x128xf32>,
    return
  }
  func.func @transform_0(%arg0: i32) -> (i32, i32) {
    %c0_i32 = arith.constant 0 : i32
    %c0_i32_0 = arith.constant 0 : i32
    return %arg0, %c0_i32 : i32, i32
  }
  func.func @transform_1(%arg0: i32) -> (i32, i32) {
    %c0_i32 = arith.constant 0 : i32
    %c0_i32_0 = arith.constant 0 : i32
    %c0_i32_1 = arith.constant 0 : i32
    return %c0_i32, %c0_i32_0 : i32, i32
  }
  func.func @transform_2(%arg0: i32) -> (i32, i32) {
    %c0_i32 = arith.constant 0 : i32
    %c0_i32_0 = arith.constant 0 : i32
    return %arg0, %c0_i32 : i32, i32
  }
}

</mosaic_0001>

<llo_original>
// kernel: learnable_sigmoid_1d.1
$region0: #{learnable_sigmoid_1d.1}
  #allocation0 [shape = 'u32[]', space=smem, size = 0x4, offset = 0x4, fixed_abs, tag = 'smem constant byte address 0x4 - core index']
  #allocation1 [shape = 'u32[72,128]{1,0:T(1,128)}', space=vmem, size = 0x9000, scoped, tag = 'internal scratch']
  %s0 = inlined_call_operand.vmem [shape: f32[16,128], index: 0, kind: input, shape index: {}]
  %s1 = inlined_call_operand.vmem [shape: f32[1,128], index: 1, kind: input, shape index: {}]
  %s2 = inlined_call_operand.vmem [shape: f32[16,128], index: 2, kind: output, shape index: {}]
  %s3 = sld [smem:[#allocation0]]
  $region18: #{learnable_sigmoid_1d.1} parent=0
    _
  %s5 = ssub.s32 1, %s3
  %s6 = scalar_select 0, %s5, %s3
  // Predicated region
  $region2: #{learnable_sigmoid_1d.1} parent=0 // pred_check
    _
  $region3: #{learnable_sigmoid_1d.1} parent=0 // pred_check_branch
    %8 = sbr.rel (0) target = $region5
  $region4: #{learnable_sigmoid_1d.1} parent=0 // pred_region
    _
  $region5: #{learnable_sigmoid_1d.1} parent=0 // pred_fallthru
    _
  // Predicated region
  $region6: #{learnable_sigmoid_1d.1} parent=0 // pred_check
    _
  $region7: #{learnable_sigmoid_1d.1} parent=0 // pred_check_branch
    %10 = sbr.rel (0) target = $region9
  $region8: #{learnable_sigmoid_1d.1} parent=0 // pred_region
    _
  $region9: #{learnable_sigmoid_1d.1} parent=0 // pred_fallthru
    _
  %v11 = vld [vmem:[%s0] sm:$0xff]
  %v12 = vld [vmem:[%s0 + $0x8] sm:$0xff]
  %v13 = vld [vmem:[%s1] sm:$0x1]
  %v15 = vperm.slane %v13, 0
  %v17 = vmul.f32 %v15, %v11
  %v18 = vmul.f32 %v15, %v12
  %v19 = vxor.u32 %v17, 2147483648
  %v20 = vxor.u32 %v18, 2147483648
  %v21 = vmul.f32 %v19, 1.442695
  %v22 = vpow.pop %v21
  %v23 = vmul.f32 %v20, 1.442695
  %v24 = vpow.pop %v23
  %v25 = vadd.f32 %v22, 1.0
  %v26 = vadd.f32 %v24, 1.0
  %v27 = vrcp.pop %v25
  %v28 = vmul.f32 %v25, %v27
  %v29 = vsub.f32 1.0, %v28
  %v30 = vmul.f32 %v27, %v29
  %v31 = vadd.f32 %v27, %v30
  %vm32 = vweird.f32 %v25
  %vm33 = vweird.f32 %v27
  %vm34 = vmor %vm32, %vm33
  %v35 = vsel %vm34, %v27, %v31
  %v36 = vand.u32 2147483647, %v25
  %vm37 = vcmp.eq.f32.partialorder %v36, 8.507059e+37
  %v38 = vand.u32 %v25, 2147483648
  %v39 = vor.u32 1.1754944e-38, %v38
  %v40 = vsel %vm37, %v39, %v35
  %v41 = vmul.f32 1.0, %v40
  %v42 = vrcp.pop %v26
  %v43 = vmul.f32 %v26, %v42
  %v44 = vsub.f32 1.0, %v43
  %v45 = vmul.f32 %v42, %v44
  %v46 = vadd.f32 %v42, %v45
  %vm47 = vweird.f32 %v26
  %vm48 = vweird.f32 %v42
  %vm49 = vmor %vm47, %vm48
  %v50 = vsel %vm49, %v42, %v46
  %v51 = vand.u32 2147483647, %v26
  %vm52 = vcmp.eq.f32.partialorder %v51, 8.507059e+37
  %v53 = vand.u32 %v26, 2147483648
  %v54 = vor.u32 1.1754944e-38, %v53
  %v55 = vsel %vm52, %v54, %v50
  %v56 = vmul.f32 1.0, %v55
  %57 = vst [vmem:[%s2] sm:$0xff] %v41
  %58 = vst [vmem:[%s2 + $0x8] sm:$0xff] %v56
  // Predicated region
  $region10: #{learnable_sigmoid_1d.1} parent=0 // pred_check
    _
  $region11: #{learnable_sigmoid_1d.1} parent=0 // pred_check_branch
    %60 = sbr.rel (0) target = $region13
  $region12: #{learnable_sigmoid_1d.1} parent=0 // pred_region
    _
  $region13: #{learnable_sigmoid_1d.1} parent=0 // pred_fallthru
    _
  // Predicated region
  $region14: #{learnable_sigmoid_1d.1} parent=0 // pred_check
    _
  $region15: #{learnable_sigmoid_1d.1} parent=0 // pred_check_branch
    %62 = sbr.rel (0) target = $region17
  $region16: #{learnable_sigmoid_1d.1} parent=0 // pred_region
    _
  $region17: #{learnable_sigmoid_1d.1} parent=0 // pred_fallthru
    _

</llo_original>
